<compile_context>
chip_gen: v5e
topology: v5e:2x2
jax: 0.10.0
libtpu: 0.0.40
codegen_flags: <defaults>
</compile_context>

<pallas_src>
import jax
import jax.numpy as jnp
from jax.experimental import pallas as pl
from jax.experimental.pallas import tpu as pltpu

EMBEDDING_DIM = 128
LN_EPS = 1e-5  # nn.LayerNorm default


def addnorm_kernel(x_ref, y_ref, gamma_ref, beta_ref, o_ref):
    # x_ref, y_ref, o_ref: (tm, D); gamma_ref, beta_ref: (1, D)
    s = x_ref[...].astype(jnp.float32) + y_ref[...].astype(jnp.float32)
    mean = jnp.mean(s, axis=-1, keepdims=True)
    centered = s - mean
    var = jnp.mean(centered * centered, axis=-1, keepdims=True)
    inv_std = jax.lax.rsqrt(var + LN_EPS)
    normed = centered * inv_std
    out = normed * gamma_ref[...].astype(jnp.float32) + beta_ref[...].astype(jnp.float32)
    o_ref[...] = out.astype(o_ref.dtype)


def _default_row_tile():
    """Generation-aware default row tile (HBM-bound kernel: bigger is better,
    but v5e's slower HBM makes 4096 the sweet spot there)."""
    try:
        kind = jax.devices()[0].device_kind.lower()
    except Exception:
        return 4096
    if "v2" in kind or "v3" in kind:
        return 1024
    if "v5 lite" in kind or "v5e" in kind or "v5litepod" in kind:
        return 4096
    # v6e / v7x / anything newer.
    return 8192


def _round_up(n, m):
    return ((n + m - 1) // m) * m


def add_norm(x, sublayer_output, gamma, beta, *, tm=None):
    """x, sublayer_output: (..., D). gamma, beta: (D,). Keeps native dtype."""
    assert x.shape == sublayer_output.shape
    D = x.shape[-1]
    assert gamma.shape == (D,) and beta.shape == (D,)

    if tm is None:
        tm = _default_row_tile()

    orig_shape = x.shape
    x2 = x.reshape(-1, D)
    y2 = sublayer_output.reshape(-1, D)
    rows = x2.shape[0]

    # Effective row tile:
    #  * never bigger than ~rows/4 (rounded to 32) so the single grid axis keeps
    #    >= ~4 steps (>= 2x TensorCores on v7x) and pipelining stays useful;
    #  * multiple of 32 so the (tm, 128) block is legal for f32/bf16/int8/fp8
    #    sublane packing;
    #  * tiny inputs collapse to one full-extent block (always a legal shape).
    quarter = _round_up(pl.cdiv(rows, 4), 32)
    tm_eff = min(tm, quarter)
    if tm_eff >= rows:
        tm_eff = rows                      # single block, full extent
    else:
        tm_eff = max(32, (tm_eff // 32) * 32)

    g2 = gamma.reshape(1, D)
    b2 = beta.reshape(1, D)

    grid = (pl.cdiv(rows, tm_eff),)

    itemsize = jnp.dtype(x.dtype).itemsize
    # Double-buffered x/y/out blocks, plus headroom for gamma/beta and Mosaic
    # internal scratch. Kept well under v7x's 64 MiB physical VMEM.
    buf_bytes = 2 * 3 * tm_eff * D * itemsize
    vmem_limit = int(min(max(buf_bytes + (16 << 20), 32 << 20), 56 << 20))

    cost = pl.CostEstimate(
        flops=rows * D * 8,
        transcendentals=rows,
        bytes_accessed=3 * rows * D * itemsize + 2 * D * 4,
    )

    out = pl.pallas_call(
        addnorm_kernel,
        out_shape=jax.ShapeDtypeStruct((rows, D), x.dtype),
        grid_spec=pltpu.PrefetchScalarGridSpec(
            num_scalar_prefetch=0,
            grid=grid,
            in_specs=[
                pl.BlockSpec((tm_eff, D), lambda i: (i, 0)),
                pl.BlockSpec((tm_eff, D), lambda i: (i, 0)),
                pl.BlockSpec((1, D), lambda i: (0, 0)),
                pl.BlockSpec((1, D), lambda i: (0, 0)),
            ],
            out_specs=pl.BlockSpec((tm_eff, D), lambda i: (i, 0)),
        ),
        compiler_params=pltpu.CompilerParams(
            dimension_semantics=("parallel",),
            vmem_limit_bytes=vmem_limit,
        ),
        cost_estimate=cost,
    )(x2, y2, g2, b2)

    return out.reshape(orig_shape)


def add_norm_ref(x, sublayer_output, gamma, beta):
    s = (x + sublayer_output).astype(jnp.float32)
    mean = jnp.mean(s, axis=-1, keepdims=True)
    var = jnp.mean((s - mean) ** 2, axis=-1, keepdims=True)
    return ((s - mean) * jax.lax.rsqrt(var + LN_EPS) * gamma + beta).astype(x.dtype)


if __name__ == "__main__":
    key = jax.random.PRNGKey(0)
    k1, k2 = jax.random.split(key)

    batch, seq, d = 2, 8, EMBEDDING_DIM
    x = jax.random.normal(k1, (batch, seq, d), dtype=jnp.float32)
    sub = jax.random.normal(k2, (batch, seq, d), dtype=jnp.float32)

    # nn.LayerNorm init: weight=ones, bias=zeros (deterministic).
    gamma = jnp.ones((d,), dtype=jnp.float32)
    beta = jnp.zeros((d,), dtype=jnp.float32)

    out = add_norm(x, sub, gamma, beta)
    out = jax.block_until_ready(out)

    ref = add_norm_ref(x, sub, gamma, beta)
    assert out.shape == (batch, seq, d)
    assert jnp.allclose(out, ref, atol=1e-5, rtol=1e-5), "mismatch vs reference"

    print("KERNEL_OK")
</pallas_src>

<mosaic_0001>
module attributes {stable_mosaic.version = 11 : i64} {
  func.func @addnorm_kernel(%arg0: i32, %arg1: memref<16x128xf32, #tpu.memory_space<vmem>>, %arg2: memref<16x128xf32, #tpu.memory_space<vmem>>, %arg3: memref<1x128xf32, #tpu.memory_space<vmem>>, %arg4: memref<1x128xf32, #tpu.memory_space<vmem>>, %arg5: memref<16x128xf32, #tpu.memory_space<vmem>>) attributes {dimension_semantics = [#tpu.dimension_semantics<parallel>], iteration_bounds = array<i64: 1>, scalar_prefetch = 0 : i64, scratch_operands = 0 : i64, tpu.core_type = #tpu.core_type<tc>, window_params = [{transform_indices = @transform_0, window_bounds = array<i64: 16, 128>}, {transform_indices = @transform_1, window_bounds = array<i64: 16, 128>}, {pipeline_mode = #tpu.pipeline_mode<synchronous>, transform_indices = @transform_2, window_bounds = array<i64: 1, 128>}, {pipeline_mode = #tpu.pipeline_mode<synchronous>, transform_indices = @transform_3, window_bounds = array<i64: 1, 128>}, {transform_indices = @transform_4, window_bounds = array<i64: 16, 128>}]} {
    %c0 = arith.constant 0 : index
    %c0_0 = arith.constant 0 : index
    %0 = vector.load %arg1[%c0, %c0_0] : memref<16x128xf32, #tpu.memory_space<vmem>>, vector<16x128xf32>
    %c0_1 = arith.constant 0 : index
    %c0_2 = arith.constant 0 : index
    %1 = vector.load %arg2[%c0_1, %c0_2] : memref<16x128xf32, #tpu.memory_space<vmem>>, vector<16x128xf32>
    %2 = arith.addf %0, %1 : vector<16x128xf32>
    %cst = arith.constant dense<0.000000e+00> : vector<16xf32>
    %3 = vector.multi_reduction <add>, %2, %cst [1] : vector<16x128xf32> to vector<16xf32>
    %4 = vector.shape_cast %3 : vector<16xf32> to vector<16x1xf32>
    %cst_3 = arith.constant 1.280000e+02 : f32
    %5 = vector.broadcast %cst_3 : f32 to vector<16x1xf32>
    %6 = arith.divf %4, %5 : vector<16x1xf32>
    %7 = vector.broadcast %6 : vector<16x1xf32> to vector<16x128xf32>
    %8 = arith.subf %2, %7 : vector<16x128xf32>
    %9 = arith.mulf %8, %8 : vector<16x128xf32>
    %cst_4 = arith.constant dense<0.000000e+00> : vector<16xf32>
    %10 = vector.multi_reduction <add>, %9, %cst_4 [1] : vector<16x128xf32> to vector<16xf32>
    %11 = vector.shape_cast %10 : vector<16xf32> to vector<16x1xf32>
    %cst_5 = arith.constant 1.280000e+02 : f32
    %12 = vector.broadcast %cst_5 : f32 to vector<16x1xf32>
    %13 = arith.divf %11, %12 : vector<16x1xf32>
    %cst_6 = arith.constant 9.99999974E-6 : f32
    %14 = vector.broadcast %cst_6 : f32 to vector<16x1xf32>
    %15 = arith.addf %13, %14 : vector<16x1xf32>
    %16 = math.rsqrt %15 : vector<16x1xf32>
    %17 = vector.broadcast %16 : vector<16x1xf32> to vector<16x128xf32>
    %18 = arith.mulf %8, %17 : vector<16x128xf32>
    %c0_7 = arith.constant 0 : index
    %c0_8 = arith.constant 0 : index
    %19 = vector.load %arg3[%c0_7, %c0_8] : memref<1x128xf32, #tpu.memory_space<vmem>>, vector<1x128xf32>
    %20 = vector.broadcast %19 : vector<1x128xf32> to vector<16x128xf32>
    %21 = arith.mulf %18, %20 : vector<16x128xf32>
    %c0_9 = arith.constant 0 : index
    %c0_10 = arith.constant 0 : index
    %22 = vector.load %arg4[%c0_9, %c0_10] : memref<1x128xf32, #tpu.memory_space<vmem>>, vector<1x128xf32>
    %23 = vector.broadcast %22 : vector<1x128xf32> to vector<16x128xf32>
    %24 = arith.addf %21, %23 : vector<16x128xf32>
    %c0_11 = arith.constant 0 : index
    %c0_12 = arith.constant 0 : index
    %25 = vector.load %arg5[%c0_11, %c0_12] : memref<16x128xf32, #tpu.memory_space<vmem>>, vector<16x128xf32>
    tpu.vector_store %arg5[%c0_11, %c0_12], %24 {strides = array<i32>} : memref<16x128xf32, #tpu.memory_space<vmem>>, vector<16x128xf32>,
    return
  }
  func.func @transform_0(%arg0: i32) -> (i32, i32) {
    %c0_i32 = arith.constant 0 : i32
    %c0_i32_0 = arith.constant 0 : i32
    return %arg0, %c0_i32 : i32, i32
  }
  func.func @transform_1(%arg0: i32) -> (i32, i32) {
    %c0_i32 = arith.constant 0 : i32
    %c0_i32_0 = arith.constant 0 : i32
    return %arg0, %c0_i32 : i32, i32
  }
  func.func @transform_2(%arg0: i32) -> (i32, i32) {
    %c0_i32 = arith.constant 0 : i32
    %c0_i32_0 = arith.constant 0 : i32
    %c0_i32_1 = arith.constant 0 : i32
    return %c0_i32, %c0_i32_0 : i32, i32
  }
  func.func @transform_3(%arg0: i32) -> (i32, i32) {
    %c0_i32 = arith.constant 0 : i32
    %c0_i32_0 = arith.constant 0 : i32
    %c0_i32_1 = arith.constant 0 : i32
    return %c0_i32, %c0_i32_0 : i32, i32
  }
  func.func @transform_4(%arg0: i32) -> (i32, i32) {
    %c0_i32 = arith.constant 0 : i32
    %c0_i32_0 = arith.constant 0 : i32
    return %arg0, %c0_i32 : i32, i32
  }
}

</mosaic_0001>

<llo_original>
// kernel: tpu_custom_call.1
$region0: #{tpu_custom_call.1}
  #allocation0 [shape = 'u32[]', space=smem, size = 0x4, offset = 0x4, fixed_abs, tag = 'smem constant byte address 0x4 - core index']
  #allocation1 [shape = 'u32[72,128]{1,0:T(1,128)}', space=vmem, size = 0x9000, scoped, tag = 'internal scratch']
  %s0 = inlined_call_operand.hbm [shape: f32[16,128], index: 0, kind: input, shape index: {}]
  %s1 = inlined_call_operand.hbm [shape: f32[16,128], index: 1, kind: input, shape index: {}]
  %s2 = inlined_call_operand.vmem [shape: f32[1,128], index: 2, kind: input, shape index: {}]
  %s3 = inlined_call_operand.vmem [shape: f32[1,128], index: 3, kind: input, shape index: {}]
  %s4 = inlined_call_operand.hbm [shape: f32[16,128], index: 4, kind: output, shape index: {}]
  %s5 = sld [smem:[#allocation0]]
  $region34: #{tpu_custom_call.1} parent=0
    _
  %s7 = ssub.s32 1, %s5
  %s8 = scalar_select 0, %s7, %s5
  $region1: #{tpu_custom_call.1} parent=0
    #allocation2 [shape = 'u8[8192]{0}', space=vmem, size = 0x2000, scoped, tag = 'input window, operand 0, single buffered']
    #allocation3 [shape = 's32[1]{0}', space=sflag, size = 0x4, scoped, tag = 'scoped memory for tpu_custom_call.1']
    #allocation4 [shape = 's32[1]{0}', space=sflag, size = 0x4, scoped, tag = 'scoped memory for tpu_custom_call.1']
    #allocation5 [shape = 'u8[8192]{0}', space=vmem, size = 0x2000, scoped, tag = 'input window, operand 1, single buffered']
    #allocation6 [shape = 's32[1]{0}', space=sflag, size = 0x4, scoped, tag = 'scoped memory for tpu_custom_call.1']
    #allocation7 [shape = 'u8[8192]{0}', space=vmem, size = 0x2000, scoped, tag = 'output window, operand 0, single buffered']
    %9 = vsyncpa [#allocation3], 0
    %10 = vsyncpa [#allocation6], 0
    %11 = vsyncpa [#allocation4], 0
    // Predicated region
    $region2: #{tpu_custom_call.1} parent=1 // pred_check
      _
    $region3: #{tpu_custom_call.1} parent=1 // pred_check_branch
      %13 = sbr.rel (0) target = $region5
    $region4: #{tpu_custom_call.1} parent=1 // pred_region
      %15 = vsyncadd [#allocation3], 0
      %s16 = sshll.u32 %s0, 4
      %s17 = int_to_ptr.hbm [resolvable:$true] %s16
      %s18 = sshll.u32 [#allocation2], 4
      %s19 = int_to_ptr.vmem [resolvable:$true] %s18
      %24 = dma.hbm_to_vmem [thread:$0]  %s17, 256, %s19, [#allocation3], 128, 128, 8
    $region5: #{tpu_custom_call.1} parent=1 // pred_fallthru
      _
    // Predicated region
    $region6: #{tpu_custom_call.1} parent=1 // pred_check
      _
    $region7: #{tpu_custom_call.1} parent=1 // pred_check_branch
      %26 = sbr.rel (0) target = $region9
    $region8: #{tpu_custom_call.1} parent=1 // pred_region
      %28 = vsyncadd [#allocation6], 0
      %s29 = sshll.u32 %s1, 4
      %s30 = int_to_ptr.hbm [resolvable:$true] %s29
      %s31 = sshll.u32 [#allocation5], 4
      %s32 = int_to_ptr.vmem [resolvable:$true] %s31
      %37 = dma.hbm_to_vmem [thread:$0]  %s30, 256, %s32, [#allocation6], 128, 128, 8
    $region9: #{tpu_custom_call.1} parent=1 // pred_fallthru
      _
    // Predicated region
    $region10: #{tpu_custom_call.1} parent=1 // pred_check
      _
    $region11: #{tpu_custom_call.1} parent=1 // pred_check_branch
      %39 = sbr.rel (0) target = $region13
    $region12: #{tpu_custom_call.1} parent=1 // pred_region
      _
    $region13: #{tpu_custom_call.1} parent=1 // pred_fallthru
      _
    // Predicated region
    $region14: #{tpu_custom_call.1} parent=1 // pred_check
      _
    $region15: #{tpu_custom_call.1} parent=1 // pred_check_branch
      %41 = sbr.rel (0) target = $region17
    $region16: #{tpu_custom_call.1} parent=1 // pred_region
      _
    $region17: #{tpu_custom_call.1} parent=1 // pred_fallthru
      _
    // Predicated region
    $region18: #{tpu_custom_call.1} parent=1 // pred_check
      _
    $region19: #{tpu_custom_call.1} parent=1 // pred_check_branch
      %43 = sbr.rel (0) target = $region21
    $region20: #{tpu_custom_call.1} parent=1 // pred_region
      %45 = dma.done [#allocation3], 256
    $region21: #{tpu_custom_call.1} parent=1 // pred_fallthru
      _
    // Predicated region
    $region22: #{tpu_custom_call.1} parent=1 // pred_check
      _
    $region23: #{tpu_custom_call.1} parent=1 // pred_check_branch
      %47 = sbr.rel (0) target = $region25
    $region24: #{tpu_custom_call.1} parent=1 // pred_region
      %49 = dma.done [#allocation6], 256
    $region25: #{tpu_custom_call.1} parent=1 // pred_fallthru
      _
    %v50 = vld [vmem:[#allocation2] sm:$0xff]
    %v51 = vld [vmem:[#allocation2 + $0x8] sm:$0xff]
    %v52 = vld [vmem:[#allocation5] sm:$0xff]
    %v53 = vld [vmem:[#allocation5 + $0x8] sm:$0xff]
    %v54 = vadd.f32 %v50, %v52
    %v55 = vadd.f32 %v51, %v53
    %56 = vadd.xlane.f32.xlu0 %v54
    %v57 = vpop.xlane.xlu0 %56
    %58 = vadd.xlane.f32.xlu0 %v55
    %v59 = vpop.xlane.xlu0 %58
    %v60 = vrcp.pop 128.0
    %v61 = vmul.f32 128.0, %v60
    %v62 = vsub.f32 1.0, %v61
    %v63 = vmul.f32 %v60, %v62
    %v64 = vadd.f32 %v60, %v63
    %vm65 = vweird.f32 %v60
    %v66 = vsel %vm65, %v60, %v64
    %v67 = vmul.f32 %v57, %v66
    %v68 = vmul.f32 %v59, %v66
    %v69 = vsub.f32 %v54, %v67
    %v70 = vsub.f32 %v55, %v68
    %v71 = vmul.f32 %v69, %v69
    %v72 = vmul.f32 %v70, %v70
    %73 = vadd.xlane.f32.xlu0 %v71
    %v74 = vpop.xlane.xlu0 %73
    %75 = vadd.xlane.f32.xlu0 %v72
    %v76 = vpop.xlane.xlu0 %75
    %v77 = vmul.f32 %v74, %v66
    %v78 = vmul.f32 %v76, %v66
    %v79 = vadd.f32 %v77, 1e-05
    %v80 = vadd.f32 %v78, 1e-05
    %v81 = vrsqrt.pop %v79
    %v82 = vmul.f32 %v81, %v79
    %v83 = vmul.f32 %v82, %v81
    %v84 = vmul.f32 0.5, %v83
    %v85 = vsub.f32 1.5, %v84
    %v86 = vmul.f32 %v81, %v85
    %vm87 = vweird.f32 %v79
    %vm88 = vweird.f32 %v81
    %vm89 = vmor %vm87, %vm88
    %v90 = vsel %vm89, %v81, %v86
    %v91 = vrsqrt.pop %v80
    %v92 = vmul.f32 %v91, %v80
    %v93 = vmul.f32 %v92, %v91
    %v94 = vmul.f32 0.5, %v93
    %v95 = vsub.f32 1.5, %v94
    %v96 = vmul.f32 %v91, %v95
    %vm97 = vweird.f32 %v80
    %vm98 = vweird.f32 %v91
    %vm99 = vmor %vm97, %vm98
    %v100 = vsel %vm99, %v91, %v96
    %v101 = vmul.f32 %v69, %v90
    %v102 = vmul.f32 %v70, %v100
    %v103 = vld [vmem:[%s2] sm:$0x1]
    %v105 = vperm.slane %v103, 0
    %v107 = vmul.f32 %v101, %v105
    %v108 = vmul.f32 %v102, %v105
    %v109 = vld [vmem:[%s3] sm:$0x1]
    %v111 = vperm.slane %v109, 0
    %v113 = vadd.f32 %v107, %v111
    %v114 = vadd.f32 %v108, %v111
    %115 = vst [vmem:[#allocation7] sm:$0xff] %v113
    %116 = vst [vmem:[#allocation7 + $0x8] sm:$0xff] %v114
    // Predicated region
    $region26: #{tpu_custom_call.1} parent=1 // pred_check
      _
    $region27: #{tpu_custom_call.1} parent=1 // pred_check_branch
      %118 = sbr.rel (0) target = $region29
    $region28: #{tpu_custom_call.1} parent=1 // pred_region
      %120 = vsyncadd [#allocation4], 0
      %s121 = sshll.u32 [#allocation7], 4
      %s122 = int_to_ptr.vmem [resolvable:$true] %s121
      %s123 = sshll.u32 %s4, 4
      %s124 = int_to_ptr.hbm [resolvable:$true] %s123
      %129 = dma.vmem_to_hbm [thread:$0]  %s122, 256, %s124, [#allocation4], 128, 128, 8
    $region29: #{tpu_custom_call.1} parent=1 // pred_fallthru
      _
    // Predicated region
    $region30: #{tpu_custom_call.1} parent=1 // pred_check
      _
    $region31: #{tpu_custom_call.1} parent=1 // pred_check_branch
      %131 = sbr.rel (0) target = $region33
    $region32: #{tpu_custom_call.1} parent=1 // pred_region
      %133 = dma.done [#allocation4], 256
    $region33: #{tpu_custom_call.1} parent=1 // pred_fallthru
      _
    %134 = vsyncpa [#allocation3], 1
    %135 = vsyncpa [#allocation6], 1
    %136 = vsyncpa [#allocation4], 1

</llo_original>
